<compile_context>
chip_gen: v7x
topology: tpu7x:2x2x1
jax: 0.10.0
libtpu: 0.0.40
codegen_flags: <defaults>
</compile_context>

<pallas_src>
import functools
import math

import jax
import jax.numpy as jnp
from jax.experimental import pallas as pl
from jax.experimental.pallas import tpu as pltpu

_VMEM_LIMIT = 32 * 1024 * 1024


# ----------------------------------------------------------------------------
# helpers (glue, plain JAX / python)
# ----------------------------------------------------------------------------
def factorint(n, multiple=True):
    """Prime factorization with multiplicity, e.g. 8 -> [2, 2, 2]."""
    fs = []
    d = 2
    m = n
    while d * d <= m:
        while m % d == 0:
            fs.append(d)
            m //= d
        d += 1
    if m > 1:
        fs.append(m)
    return fs


def tr_full_weight(key, input_size, output_size, ranks):
    """Dense (prod(input_size), prod(output_size)) weight equivalent to a
    TRLinear, obtained by contracting its tensor-ring cores."""
    dims = list(input_size) + list(output_size)
    assert len(ranks) == len(dims)
    cores = []
    for k, d in enumerate(dims):
        key, sub = jax.random.split(key)
        r_left = ranks[k - 1]
        r_right = ranks[k]
        scale = 1.0 / math.sqrt(d * r_left)
        cores.append(scale * jax.random.normal(sub, (r_left, d, r_right),
                                               jnp.float32))
    full = cores[0]
    for core in cores[1:]:
        full = jnp.einsum('adb,bec->adec', full, core)
        full = full.reshape(full.shape[0], -1, full.shape[-1])
    w = jnp.trace(full, axis1=0, axis2=2)  # close the ring
    n_in = int(math.prod(input_size))
    n_out = int(math.prod(output_size))
    return w.reshape(n_in, n_out)
    # TODO(synk): TRLinear bias term (if present in tr.TRLinear) is omitted.


# ----------------------------------------------------------------------------
# Pallas kernels
# ----------------------------------------------------------------------------
def _qkv_proj_kernel(xq_ref, xk_ref, xv_ref, wq_ref, wk_ref, wv_ref,
                     q_ref, k_ref, v_ref):
    # X blocks: (B, n_in) f32 -> bf16; W blocks: (n_in, tn) bf16; out: (B, tn) f32
    xq = xq_ref[...].astype(jnp.bfloat16)
    xk = xk_ref[...].astype(jnp.bfloat16)
    xv = xv_ref[...].astype(jnp.bfloat16)
    q_ref[...] = jnp.dot(xq, wq_ref[...], preferred_element_type=jnp.float32)
    k_ref[...] = jnp.dot(xk, wk_ref[...], preferred_element_type=jnp.float32)
    v_ref[...] = jnp.dot(xv, wv_ref[...], preferred_element_type=jnp.float32)


def qkv_project(xq, xk, xv, wq, wk, wv):
    """Fused Q/K/V projection: one pallas_call, grid over 128-wide output
    column tiles (lane-dense stores)."""
    B, n_in = xq.shape
    n_qk = wq.shape[1]
    n_v = wv.shape[1]
    # TODO(synk): if d_keys != d_values (n_qk != n_v) the fused column grid
    # would need per-output tiling; default config has them equal.
    assert n_qk == n_v
    tn = 128 if n_qk % 128 == 0 else n_qk
    # TODO(synk): for large n_in add a K-tiled ("arbitrary") axis + f32 VMEM
    # accumulator; at these sizes the full contraction fits comfortably.
    return pl.pallas_call(
        _qkv_proj_kernel,
        out_shape=(jax.ShapeDtypeStruct((B, n_qk), jnp.float32),
                   jax.ShapeDtypeStruct((B, n_qk), jnp.float32),
                   jax.ShapeDtypeStruct((B, n_v), jnp.float32)),
        grid_spec=pltpu.PrefetchScalarGridSpec(
            num_scalar_prefetch=0,
            grid=(n_qk // tn,),
            in_specs=[
                pl.BlockSpec((B, n_in), lambda j: (0, 0)),
                pl.BlockSpec((B, n_in), lambda j: (0, 0)),
                pl.BlockSpec((B, n_in), lambda j: (0, 0)),
                pl.BlockSpec((n_in, tn), lambda j: (0, j)),
                pl.BlockSpec((n_in, tn), lambda j: (0, j)),
                pl.BlockSpec((n_in, tn), lambda j: (0, j)),
            ],
            out_specs=(
                pl.BlockSpec((B, tn), lambda j: (0, j)),
                pl.BlockSpec((B, tn), lambda j: (0, j)),
                pl.BlockSpec((B, tn), lambda j: (0, j)),
            ),
        ),
        compiler_params=pltpu.CompilerParams(
            dimension_semantics=("parallel",),
            vmem_limit_bytes=_VMEM_LIMIT),
    )(xq, xk, xv, wq, wk, wv)


def _out_proj_kernel(x_ref, w_ref, o_ref):
    o_ref[...] = jnp.dot(x_ref[...].astype(jnp.bfloat16), w_ref[...],
                         preferred_element_type=jnp.float32)


def out_project(x2d, w):
    B, n_in = x2d.shape
    n_out = w.shape[1]
    tn = 128 if n_out % 128 == 0 else n_out
    return pl.pallas_call(
        _out_proj_kernel,
        out_shape=jax.ShapeDtypeStruct((B, n_out), jnp.float32),
        grid_spec=pltpu.PrefetchScalarGridSpec(
            num_scalar_prefetch=0,
            grid=(n_out // tn,),
            in_specs=[pl.BlockSpec((B, n_in), lambda j: (0, 0)),
                      pl.BlockSpec((n_in, tn), lambda j: (0, j))],
            out_specs=pl.BlockSpec((B, tn), lambda j: (0, j)),
        ),
        compiler_params=pltpu.CompilerParams(
            dimension_semantics=("parallel",),
            vmem_limit_bytes=_VMEM_LIMIT),
    )(x2d, w)


def _attention_kernel(q_ref, k_ref, v_ref, o_ref, a_ref, *, scale):
    # q_ref: (1, L, H, E); k_ref: (1, S, H, E); v_ref: (1, S, H, Dv)
    # o_ref: (1, L, H, Dv); a_ref: (1, H, L, S)
    n_heads = q_ref.shape[2]
    for h in range(n_heads):  # static unroll: all heads in one grid step
        q = q_ref[0, :, h, :].astype(jnp.bfloat16)          # (L, E)
        k = k_ref[0, :, h, :].astype(jnp.bfloat16)          # (S, E)
        v = v_ref[0, :, h, :].astype(jnp.bfloat16)          # (S, Dv)
        s = jnp.dot(q, k.T, preferred_element_type=jnp.float32) * scale
        m = jnp.max(s, axis=-1, keepdims=True)
        e = jnp.exp(s - m)
        p = e * pl.reciprocal(jnp.sum(e, axis=-1, keepdims=True), approx=True)
        a_ref[0, h, :, :] = p
        o_ref[0, :, h, :] = jnp.dot(p.astype(jnp.bfloat16), v,
                                    preferred_element_type=jnp.float32)
    # TODO(synk): flash-style online-softmax S-tiling (and optional attn
    # materialization) needed only if L/S grow far beyond these sizes.


def full_attention(q, k, v):
    """q,k: (B, L/S, H, E); v: (B, S, H, Dv). Returns out (B, L, H, Dv) and
    attn (B, H, L, S). No wrapper transposes: blocks are taken directly from
    the projection layout. attn_mask is None (no masking)."""
    B, L, H, E = q.shape
    S = k.shape[1]
    Dv = v.shape[3]
    scale = 1.0 / math.sqrt(E)
    out, attn = pl.pallas_call(
        functools.partial(_attention_kernel, scale=scale),
        out_shape=(jax.ShapeDtypeStruct((B, L, H, Dv), jnp.float32),
                   jax.ShapeDtypeStruct((B, H, L, S), jnp.float32)),
        grid_spec=pltpu.PrefetchScalarGridSpec(
            num_scalar_prefetch=0,
            grid=(B,),
            in_specs=[
                pl.BlockSpec((1, L, H, E), lambda b: (b, 0, 0, 0)),
                pl.BlockSpec((1, S, H, E), lambda b: (b, 0, 0, 0)),
                pl.BlockSpec((1, S, H, Dv), lambda b: (b, 0, 0, 0)),
            ],
            out_specs=(
                pl.BlockSpec((1, L, H, Dv), lambda b: (b, 0, 0, 0)),
                pl.BlockSpec((1, H, L, S), lambda b: (b, 0, 0, 0)),
            ),
        ),
        compiler_params=pltpu.CompilerParams(
            dimension_semantics=("parallel",),
            vmem_limit_bytes=_VMEM_LIMIT),
    )(q, k, v)
    return out, attn


# ----------------------------------------------------------------------------
# AttentionLayer init / forward
# ----------------------------------------------------------------------------
def init_attention_layer(key, seq_len, r, d_model, n_heads,
                         d_keys=None, d_values=None):
    d_keys = d_keys or d_model // n_heads
    d_values = d_values or d_model // n_heads
    input_size = factorint(seq_len, multiple=True) + [d_model]
    out_qk = [seq_len, d_keys * n_heads]
    out_v = [seq_len, d_values * n_heads]
    ranks_qk = [r] * (len(input_size) + len(out_qk))
    ranks_v = [r] * (len(input_size) + len(out_v))
    kq, kk, kv, ko = jax.random.split(key, 4)
    # Weights materialized once and stored as bf16 (native MXU input dtype);
    # all matmuls accumulate in f32.
    params = {
        "Wq": tr_full_weight(kq, input_size, out_qk, ranks_qk).astype(jnp.bfloat16),
        "Wk": tr_full_weight(kk, input_size, out_qk, ranks_qk).astype(jnp.bfloat16),
        "Wv": tr_full_weight(kv, input_size, out_v, ranks_v).astype(jnp.bfloat16),
        "Wo": tr_full_weight(ko, out_v, input_size, ranks_v).astype(jnp.bfloat16),
        "n_heads": n_heads,
        "d_keys": d_keys,
        "d_values": d_values,
    }
    return params


def attention_layer_forward(params, queries, keys, values, attn_mask=None,
                            tau=None, delta=None):
    # TODO(synk): attn_mask / dropout paths of FullAttention are not
    # implemented (eval mode, no mask assumed); attn_mask is ignored.
    B, L, dm = queries.shape
    _, S, _ = keys.shape
    H = params["n_heads"]
    dk = params["d_keys"]
    dv = params["d_values"]

    # Fused Q/K/V projection (single pallas_call).
    qf, kf, vf = qkv_project(queries.reshape(B, L * dm),
                             keys.reshape(B, S * dm),
                             values.reshape(B, S * dm),
                             params["Wq"], params["Wk"], params["Wv"])

    # Free reshapes only (no XLA transposes); matches torch .view(B, L, H, -1).
    q = qf.reshape(B, L, H, dk)
    k = kf.reshape(B, S, H, dk)
    v = vf.reshape(B, S, H, dv)

    out, attn = full_attention(q, k, v)      # (B, L, H, dv), (B, H, L, S)

    # (B, L, H, dv) row-major flatten == torch out.view(B, L, H*dv).
    out = out_project(out.reshape(B, L * H * dv), params["Wo"]).reshape(B, L, -1)
    return out, attn


# ----------------------------------------------------------------------------
# main
# ----------------------------------------------------------------------------
if __name__ == "__main__":
    B = 2
    seq_len = 8          # L == S == seq_len (TR factorization fixes seq length)
    d_model = 32
    n_heads = 4
    r = 2

    key = jax.random.PRNGKey(0)
    kp, kq, kk, kv = jax.random.split(key, 4)

    params = init_attention_layer(kp, seq_len, r, d_model, n_heads)

    queries = jax.random.normal(kq, (B, seq_len, d_model), jnp.float32)
    keys = jax.random.normal(kk, (B, seq_len, d_model), jnp.float32)
    values = jax.random.normal(kv, (B, seq_len, d_model), jnp.float32)

    out, attn = attention_layer_forward(params, queries, keys, values,
                                        attn_mask=None)
    jax.block_until_ready((out, attn))

    assert out.shape == (B, seq_len, d_model)
    assert attn.shape == (B, n_heads, seq_len, seq_len)
    print("KERNEL_OK")
</pallas_src>

<mosaic_0001>
module attributes {stable_mosaic.version = 11 : i64} {
  func.func @_qkv_proj_kernel(%arg0: i32, %arg1: memref<2x256xf32, #tpu.memory_space<vmem>>, %arg2: memref<2x256xf32, #tpu.memory_space<vmem>>, %arg3: memref<2x256xf32, #tpu.memory_space<vmem>>, %arg4: memref<256x128xbf16, #tpu.memory_space<vmem>>, %arg5: memref<256x128xbf16, #tpu.memory_space<vmem>>, %arg6: memref<256x128xbf16, #tpu.memory_space<vmem>>, %arg7: memref<2x128xf32, #tpu.memory_space<vmem>>, %arg8: memref<2x128xf32, #tpu.memory_space<vmem>>, %arg9: memref<2x128xf32, #tpu.memory_space<vmem>>) attributes {dimension_semantics = [#tpu.dimension_semantics<parallel>], iteration_bounds = array<i64: 2>, scalar_prefetch = 0 : i64, scratch_operands = 0 : i64, tpu.core_type = #tpu.core_type<tc>, window_params = [{pipeline_mode = #tpu.pipeline_mode<synchronous>, transform_indices = @transform_0, window_bounds = array<i64: 2, 256>}, {pipeline_mode = #tpu.pipeline_mode<synchronous>, transform_indices = @transform_1, window_bounds = array<i64: 2, 256>}, {pipeline_mode = #tpu.pipeline_mode<synchronous>, transform_indices = @transform_2, window_bounds = array<i64: 2, 256>}, {transform_indices = @transform_3, window_bounds = array<i64: 256, 128>}, {transform_indices = @transform_4, window_bounds = array<i64: 256, 128>}, {transform_indices = @transform_5, window_bounds = array<i64: 256, 128>}, {transform_indices = @transform_6, window_bounds = array<i64: 2, 128>}, {transform_indices = @transform_7, window_bounds = array<i64: 2, 128>}, {transform_indices = @transform_8, window_bounds = array<i64: 2, 128>}]} {
    %c0 = arith.constant 0 : index
    %c0_0 = arith.constant 0 : index
    %0 = vector.load %arg1[%c0, %c0_0] : memref<2x256xf32, #tpu.memory_space<vmem>>, vector<2x256xf32>
    %1 = arith.truncf %0 : vector<2x256xf32> to vector<2x256xbf16>
    %c0_1 = arith.constant 0 : index
    %c0_2 = arith.constant 0 : index
    %2 = vector.load %arg2[%c0_1, %c0_2] : memref<2x256xf32, #tpu.memory_space<vmem>>, vector<2x256xf32>
    %3 = arith.truncf %2 : vector<2x256xf32> to vector<2x256xbf16>
    %c0_3 = arith.constant 0 : index
    %c0_4 = arith.constant 0 : index
    %4 = vector.load %arg3[%c0_3, %c0_4] : memref<2x256xf32, #tpu.memory_space<vmem>>, vector<2x256xf32>
    %5 = arith.truncf %4 : vector<2x256xf32> to vector<2x256xbf16>
    %c0_5 = arith.constant 0 : index
    %c0_6 = arith.constant 0 : index
    %6 = vector.load %arg4[%c0_5, %c0_6] : memref<256x128xbf16, #tpu.memory_space<vmem>>, vector<256x128xbf16>
    %cst = arith.constant dense<0.000000e+00> : vector<2x128xf32>
    %7 = tpu.matmul %1, %6, %cst {dimension_numbers = #tpu.dot_dimension_numbers<[1], [0], [0], [1], [0, 0, 1, 1], [], []>} : vector<2x256xbf16>, vector<256x128xbf16>, vector<2x128xf32> -> vector<2x128xf32>
    %c0_7 = arith.constant 0 : index
    %c0_8 = arith.constant 0 : index
    %8 = vector.load %arg7[%c0_7, %c0_8] : memref<2x128xf32, #tpu.memory_space<vmem>>, vector<2x128xf32>
    tpu.vector_store %arg7[%c0_7, %c0_8], %7 {strides = array<i32>} : memref<2x128xf32, #tpu.memory_space<vmem>>, vector<2x128xf32>,
    %c0_9 = arith.constant 0 : index
    %c0_10 = arith.constant 0 : index
    %9 = vector.load %arg5[%c0_9, %c0_10] : memref<256x128xbf16, #tpu.memory_space<vmem>>, vector<256x128xbf16>
    %cst_11 = arith.constant dense<0.000000e+00> : vector<2x128xf32>
    %10 = tpu.matmul %3, %9, %cst_11 {dimension_numbers = #tpu.dot_dimension_numbers<[1], [0], [0], [1], [0, 0, 1, 1], [], []>} : vector<2x256xbf16>, vector<256x128xbf16>, vector<2x128xf32> -> vector<2x128xf32>
    %c0_12 = arith.constant 0 : index
    %c0_13 = arith.constant 0 : index
    %11 = vector.load %arg8[%c0_12, %c0_13] : memref<2x128xf32, #tpu.memory_space<vmem>>, vector<2x128xf32>
    tpu.vector_store %arg8[%c0_12, %c0_13], %10 {strides = array<i32>} : memref<2x128xf32, #tpu.memory_space<vmem>>, vector<2x128xf32>,
    %c0_14 = arith.constant 0 : index
    %c0_15 = arith.constant 0 : index
    %12 = vector.load %arg6[%c0_14, %c0_15] : memref<256x128xbf16, #tpu.memory_space<vmem>>, vector<256x128xbf16>
    %cst_16 = arith.constant dense<0.000000e+00> : vector<2x128xf32>
    %13 = tpu.matmul %5, %12, %cst_16 {dimension_numbers = #tpu.dot_dimension_numbers<[1], [0], [0], [1], [0, 0, 1, 1], [], []>} : vector<2x256xbf16>, vector<256x128xbf16>, vector<2x128xf32> -> vector<2x128xf32>
    %c0_17 = arith.constant 0 : index
    %c0_18 = arith.constant 0 : index
    %14 = vector.load %arg9[%c0_17, %c0_18] : memref<2x128xf32, #tpu.memory_space<vmem>>, vector<2x128xf32>
    tpu.vector_store %arg9[%c0_17, %c0_18], %13 {strides = array<i32>} : memref<2x128xf32, #tpu.memory_space<vmem>>, vector<2x128xf32>,
    return
  }
  func.func @transform_0(%arg0: i32) -> (i32, i32) {
    %c0_i32 = arith.constant 0 : i32
    %c0_i32_0 = arith.constant 0 : i32
    %c0_i32_1 = arith.constant 0 : i32
    return %c0_i32, %c0_i32_0 : i32, i32
  }
  func.func @transform_1(%arg0: i32) -> (i32, i32) {
    %c0_i32 = arith.constant 0 : i32
    %c0_i32_0 = arith.constant 0 : i32
    %c0_i32_1 = arith.constant 0 : i32
    return %c0_i32, %c0_i32_0 : i32, i32
  }
  func.func @transform_2(%arg0: i32) -> (i32, i32) {
    %c0_i32 = arith.constant 0 : i32
    %c0_i32_0 = arith.constant 0 : i32
    %c0_i32_1 = arith.constant 0 : i32
    return %c0_i32, %c0_i32_0 : i32, i32
  }
  func.func @transform_3(%arg0: i32) -> (i32, i32) {
    %c0_i32 = arith.constant 0 : i32
    %c0_i32_0 = arith.constant 0 : i32
    return %c0_i32, %arg0 : i32, i32
  }
  func.func @transform_4(%arg0: i32) -> (i32, i32) {
    %c0_i32 = arith.constant 0 : i32
    %c0_i32_0 = arith.constant 0 : i32
    return %c0_i32, %arg0 : i32, i32
  }
  func.func @transform_5(%arg0: i32) -> (i32, i32) {
    %c0_i32 = arith.constant 0 : i32
    %c0_i32_0 = arith.constant 0 : i32
    return %c0_i32, %arg0 : i32, i32
  }
  func.func @transform_6(%arg0: i32) -> (i32, i32) {
    %c0_i32 = arith.constant 0 : i32
    %c0_i32_0 = arith.constant 0 : i32
    return %c0_i32, %arg0 : i32, i32
  }
  func.func @transform_7(%arg0: i32) -> (i32, i32) {
    %c0_i32 = arith.constant 0 : i32
    %c0_i32_0 = arith.constant 0 : i32
    return %c0_i32, %arg0 : i32, i32
  }
  func.func @transform_8(%arg0: i32) -> (i32, i32) {
    %c0_i32 = arith.constant 0 : i32
    %c0_i32_0 = arith.constant 0 : i32
    return %c0_i32, %arg0 : i32, i32
  }
}

</mosaic_0001>

<llo_original>
// kernel: tpu_custom_call.1
$region0: #{tpu_custom_call.1}
  #allocation0 [shape = 'u32[]', space=smem, size = 0x4, offset = 0x4, fixed_abs, tag = 'smem constant byte address 0x4 - core index']
  #allocation1 [shape = 'u32[144,128]{1,0:T(1,128)}', space=vmem, size = 0x12000, scoped, tag = 'internal scratch']
  %s0 = inlined_call_operand.hbm [shape: f32[2,256], index: 0, kind: input, shape index: {}]
  %s1 = inlined_call_operand.hbm [shape: f32[2,256], index: 1, kind: input, shape index: {}]
  %s2 = inlined_call_operand.vmem [shape: f32[2,256], index: 2, kind: input, shape index: {}]
  %s3 = inlined_call_operand.hbm [shape: bf16[256,256], index: 3, kind: input, shape index: {}]
  %s4 = inlined_call_operand.hbm [shape: bf16[256,256], index: 4, kind: input, shape index: {}]
  %s5 = inlined_call_operand.hbm [shape: bf16[256,256], index: 5, kind: input, shape index: {}]
  %s6 = inlined_call_operand.hbm [shape: f32[2,256], index: 6, kind: output, shape index: {0}]
  %s7 = inlined_call_operand.hbm [shape: f32[2,256], index: 7, kind: output, shape index: {1}]
  %s8 = inlined_call_operand.hbm [shape: f32[2,256], index: 8, kind: output, shape index: {2}]
  %9 = xla_tuple %s6, %s7, %s8
  %s10 = sld [smem:[#allocation0]]
  $region93: #{tpu_custom_call.1} parent=0
    _
  %s12 = ssub.s32 1, %s10
  %s13 = scalar_select 0, %s12, %s10
  $region1: #{tpu_custom_call.1} parent=0
    #allocation2 [shape = 'u8[2048]{0}', space=vmem, size = 0x800, scoped, tag = 'input window, operand 0, single buffered']
    #allocation3 [shape = 's32[2]{0}', space=sflag, size = 0x8, scoped, tag = 'scoped memory for tpu_custom_call.1']
    #allocation4 [shape = 's32[2]{0}', space=sflag, size = 0x8, scoped, tag = 'scoped memory for tpu_custom_call.1']
    #allocation5 [shape = 'u8[2048]{0}', space=vmem, size = 0x800, scoped, tag = 'input window, operand 1, single buffered']
    #allocation6 [shape = 's32[1]{0}', space=sflag, size = 0x4, scoped, tag = 'scoped memory for tpu_custom_call.1']
    #allocation7 [shape = 'u8[131072]{0}', space=vmem, size = 0x20000, scoped, tag = 'input window, operand 3']
    #allocation8 [shape = 'u8[131072]{0}', space=vmem, size = 0x20000, scoped, tag = 'input window, operand 4']
    #allocation9 [shape = 'u8[131072]{0}', space=vmem, size = 0x20000, scoped, tag = 'input window, operand 5']
    #allocation10 [shape = 'u8[2048]{0}', space=vmem, size = 0x800, scoped, tag = 'output window, operand 0']
    #allocation11 [shape = 'u8[2048]{0}', space=vmem, size = 0x800, scoped, tag = 'output window, operand 1']
    #allocation12 [shape = 's32[2]{0}', space=sflag, size = 0x8, scoped, tag = 'scoped memory for tpu_custom_call.1']
    #allocation13 [shape = 'u8[2048]{0}', space=vmem, size = 0x800, scoped, tag = 'output window, operand 2']
    %14 = vsyncpa [#allocation3], 0
    %15 = vsyncpa [#allocation6], 0
    %16 = vsyncpa [#allocation4], 0
    %s17 = scalar_lea.sflag [#allocation4], 1
    %18 = vsyncpa %s17, 0
    %19 = vsyncpa [#allocation12], 0
    %s20 = scalar_lea.sflag [#allocation12], 1
    %21 = vsyncpa %s20, 0
    loop: start=0, step=1, limit=4
    $region2: #{tpu_custom_call.1} parent=1 // loop_pre_header
      _
    $region3: #{tpu_custom_call.1} parent=1 // loop_header
      %s23 = sphi 0, %s27
      %p24 = scmp.ge.s32.totalorder %s23, 4
      %s31 = sphi 0, %s31
      %s33 = sphi 0, %s31
      %s34 = sphi 0, %s33
      %s48 = sphi 0, %s34
      %s52 = sphi 0, %s52
      %s54 = sphi 0, %s52
      %s55 = sphi 0, %s54
      %s69 = sphi 0, %s55
      %s73 = sphi 0, %s73
      %s75 = sphi 0, %s73
      %s76 = sphi 0, %s75
      %s90 = sphi 0, %s76
      %s96 = sphi 0, %s98
      %s99 = sphi 0, %s96
      %s100 = sphi 0, %s99
      %s116 = sphi 0, %s100
      %s122 = sphi 0, %s124
      %s125 = sphi 0, %s122
      %s126 = sphi 0, %s125
      %s142 = sphi 0, %s126
      %s148 = sphi 0, %s150
      %s151 = sphi 0, %s148
      %s152 = sphi 0, %s151
      %s168 = sphi 0, %s152
      %s174 = sphi 0, %s176
      %s177 = sphi 0, %s174
      %s178 = sphi 0, %s177
      %s194 = sphi 0, %s178
      %s200 = sphi 0, %s202
      %s203 = sphi 0, %s200
      %s204 = sphi 0, %s203
      %s220 = sphi 0, %s204
      %s226 = sphi 0, %s228
      %s229 = sphi 0, %s226
      %s230 = sphi 0, %s229
      %s246 = sphi 0, %s230
    $region4: #{tpu_custom_call.1} parent=1 // loop_header_branch
      %26 = sbr.rel (%p24) target = $region8
    $region5: #{tpu_custom_call.1} parent=1 // loop_body
      %s28 = ssub.s32 %s23, 1
      %s29 = ssub.s32 %s23, 2
      %s30 = sadd.s32 %s23, 1
      %s32 = sadd.s32 %s31, 1
      %p35 = scmp.eq.s32.totalorder %s23, 1
      %p36 = scmp.ne.s32.totalorder %s31, %s33
      %p37 = scmp.eq.s32.totalorder %s23, 0
      %p38 = por %p36, %p37
      %p39 = scmp.ne.s32.totalorder %s31, %s33
      %p40 = scmp.eq.s32.totalorder %s28, 1
      %p41 = por %p39, %p40
      %p42 = scmp.ne.s32.totalorder %s33, %s34
      %p43 = scmp.eq.s32.totalorder %s28, 0
      %p44 = por %p42, %p43
      %p45 = scmp.ne.s32.totalorder %s33, %s34
      %p46 = scmp.eq.s32.totalorder %s29, 1
      %p47 = por %p45, %p46
      %p49 = scmp.ne.s32.totalorder %s34, %s48
      %p50 = scmp.eq.s32.totalorder %s29, 0
      %p51 = por %p49, %p50
      %s53 = sadd.s32 %s52, 1
      %p56 = scmp.eq.s32.totalorder %s23, 1
      %p57 = scmp.ne.s32.totalorder %s52, %s54
      %p58 = scmp.eq.s32.totalorder %s23, 0
      %p59 = por %p57, %p58
      %p60 = scmp.ne.s32.totalorder %s52, %s54
      %p61 = scmp.eq.s32.totalorder %s28, 1
      %p62 = por %p60, %p61
      %p63 = scmp.ne.s32.totalorder %s54, %s55
      %p64 = scmp.eq.s32.totalorder %s28, 0
      %p65 = por %p63, %p64
      %p66 = scmp.ne.s32.totalorder %s54, %s55
      %p67 = scmp.eq.s32.totalorder %s29, 1
      %p68 = por %p66, %p67
      %p70 = scmp.ne.s32.totalorder %s55, %s69
      %p71 = scmp.eq.s32.totalorder %s29, 0
      %p72 = por %p70, %p71
      %s74 = sadd.s32 %s73, 1
      %p77 = scmp.eq.s32.totalorder %s23, 1
      %p78 = scmp.ne.s32.totalorder %s73, %s75
      %p79 = scmp.eq.s32.totalorder %s23, 0
      %p80 = por %p78, %p79
      %p81 = scmp.ne.s32.totalorder %s73, %s75
      %p82 = scmp.eq.s32.totalorder %s28, 1
      %p83 = por %p81, %p82
      %p84 = scmp.ne.s32.totalorder %s75, %s76
      %p85 = scmp.eq.s32.totalorder %s28, 0
      %p86 = por %p84, %p85
      %p87 = scmp.ne.s32.totalorder %s75, %s76
      %p88 = scmp.eq.s32.totalorder %s29, 1
      %p89 = por %p87, %p88
      %p91 = scmp.ne.s32.totalorder %s76, %s90
      %p92 = scmp.eq.s32.totalorder %s29, 0
      %p93 = por %p91, %p92
      %s94 = ssub.s32 %s23, %s30
      %p95 = scmp.eq.s32.totalorder %s94, 0
      %s97 = sadd.s32 %s96, 1
      %s98 = scalar_select %p95, %s96, %s97
      %p101 = pneg %p95
      %p102 = scmp.eq.s32.totalorder %s23, 1
      %p103 = por %p101, %p102
      %p104 = scmp.ne.s32.totalorder %s96, %s99
      %p105 = scmp.eq.s32.totalorder %s23, 0
      %p106 = por %p104, %p105
      %p107 = scmp.ne.s32.totalorder %s96, %s99
      %p108 = scmp.eq.s32.totalorder %s28, 1
      %p109 = por %p107, %p108
      %p110 = scmp.ne.s32.totalorder %s99, %s100
      %p111 = scmp.eq.s32.totalorder %s28, 0
      %p112 = por %p110, %p111
      %p113 = scmp.ne.s32.totalorder %s99, %s100
      %p114 = scmp.eq.s32.totalorder %s29, 1
      %p115 = por %p113, %p114
      %p117 = scmp.ne.s32.totalorder %s100, %s116
      %p118 = scmp.eq.s32.totalorder %s29, 0
      %p119 = por %p117, %p118
      %s120 = ssub.s32 %s23, %s30
      %p121 = scmp.eq.s32.totalorder %s120, 0
      %s123 = sadd.s32 %s122, 1
      %s124 = scalar_select %p121, %s122, %s123
      %p127 = pneg %p121
      %p128 = scmp.eq.s32.totalorder %s23, 1
      %p129 = por %p127, %p128
      %p130 = scmp.ne.s32.totalorder %s122, %s125
      %p131 = scmp.eq.s32.totalorder %s23, 0
      %p132 = por %p130, %p131
      %p133 = scmp.ne.s32.totalorder %s122, %s125
      %p134 = scmp.eq.s32.totalorder %s28, 1
      %p135 = por %p133, %p134
      %p136 = scmp.ne.s32.totalorder %s125, %s126
      %p137 = scmp.eq.s32.totalorder %s28, 0
      %p138 = por %p136, %p137
      %p139 = scmp.ne.s32.totalorder %s125, %s126
      %p140 = scmp.eq.s32.totalorder %s29, 1
      %p141 = por %p139, %p140
      %p143 = scmp.ne.s32.totalorder %s126, %s142
      %p144 = scmp.eq.s32.totalorder %s29, 0
      %p145 = por %p143, %p144
      %s146 = ssub.s32 %s23, %s30
      %p147 = scmp.eq.s32.totalorder %s146, 0
      %s149 = sadd.s32 %s148, 1
      %s150 = scalar_select %p147, %s148, %s149
      %p153 = pneg %p147
      %p154 = scmp.eq.s32.totalorder %s23, 1
      %p155 = por %p153, %p154
      %p156 = scmp.ne.s32.totalorder %s148, %s151
      %p157 = scmp.eq.s32.totalorder %s23, 0
      %p158 = por %p156, %p157
      %p159 = scmp.ne.s32.totalorder %s148, %s151
      %p160 = scmp.eq.s32.totalorder %s28, 1
      %p161 = por %p159, %p160
      %p162 = scmp.ne.s32.totalorder %s151, %s152
      %p163 = scmp.eq.s32.totalorder %s28, 0
      %p164 = por %p162, %p163
      %p165 = scmp.ne.s32.totalorder %s151, %s152
      %p166 = scmp.eq.s32.totalorder %s29, 1
      %p167 = por %p165, %p166
      %p169 = scmp.ne.s32.totalorder %s152, %s168
      %p170 = scmp.eq.s32.totalorder %s29, 0
      %p171 = por %p169, %p170
      %s172 = ssub.s32 %s23, %s30
      %p173 = scmp.eq.s32.totalorder %s172, 0
      %s175 = sadd.s32 %s174, 1
      %s176 = scalar_select %p173, %s174, %s175
      %p179 = pneg %p173
      %p180 = scmp.eq.s32.totalorder %s23, 1
      %p181 = por %p179, %p180
      %p182 = scmp.ne.s32.totalorder %s174, %s177
      %p183 = scmp.eq.s32.totalorder %s23, 0
      %p184 = por %p182, %p183
      %p185 = scmp.ne.s32.totalorder %s174, %s177
      %p186 = scmp.eq.s32.totalorder %s28, 1
      %p187 = por %p185, %p186
      %p188 = scmp.ne.s32.totalorder %s177, %s178
      %p189 = scmp.eq.s32.totalorder %s28, 0
      %p190 = por %p188, %p189
      %p191 = scmp.ne.s32.totalorder %s177, %s178
      %p192 = scmp.eq.s32.totalorder %s29, 1
      %p193 = por %p191, %p192
      %p195 = scmp.ne.s32.totalorder %s178, %s194
      %p196 = scmp.eq.s32.totalorder %s29, 0
      %p197 = por %p195, %p196
      %s198 = ssub.s32 %s23, %s30
      %p199 = scmp.eq.s32.totalorder %s198, 0
      %s201 = sadd.s32 %s200, 1
      %s202 = scalar_select %p199, %s200, %s201
      %p205 = pneg %p199
      %p206 = scmp.eq.s32.totalorder %s23, 1
      %p207 = por %p205, %p206
      %p208 = scmp.ne.s32.totalorder %s200, %s203
      %p209 = scmp.eq.s32.totalorder %s23, 0
      %p210 = por %p208, %p209
      %p211 = scmp.ne.s32.totalorder %s200, %s203
      %p212 = scmp.eq.s32.totalorder %s28, 1
      %p213 = por %p211, %p212
      %p214 = scmp.ne.s32.totalorder %s203, %s204
      %p215 = scmp.eq.s32.totalorder %s28, 0
      %p216 = por %p214, %p215
      %p217 = scmp.ne.s32.totalorder %s203, %s204
      %p218 = scmp.eq.s32.totalorder %s29, 1
      %p219 = por %p217, %p218
      %p221 = scmp.ne.s32.totalorder %s204, %s220
      %p222 = scmp.eq.s32.totalorder %s29, 0
      %p223 = por %p221, %p222
      %s224 = ssub.s32 %s23, %s30
      %p225 = scmp.eq.s32.totalorder %s224, 0
      %s227 = sadd.s32 %s226, 1
      %s228 = scalar_select %p225, %s226, %s227
      %p231 = pneg %p225
      %p232 = scmp.eq.s32.totalorder %s23, 1
      %p233 = por %p231, %p232
      %p234 = scmp.ne.s32.totalorder %s226, %s229
      %p235 = scmp.eq.s32.totalorder %s23, 0
      %p236 = por %p234, %p235
      %p237 = scmp.ne.s32.totalorder %s226, %s229
      %p238 = scmp.eq.s32.totalorder %s28, 1
      %p239 = por %p237, %p238
      %p240 = scmp.ne.s32.totalorder %s229, %s230
      %p241 = scmp.eq.s32.totalorder %s28, 0
      %p242 = por %p240, %p241
      %p243 = scmp.ne.s32.totalorder %s229, %s230
      %p244 = scmp.eq.s32.totalorder %s29, 1
      %p245 = por %p243, %p244
      %p247 = scmp.ne.s32.totalorder %s230, %s246
      %p248 = scmp.eq.s32.totalorder %s29, 0
      %p249 = por %p247, %p248
      %p250 = scmp.le.s32.totalorder 1, %s23
      %p251 = scmp.lt.s32.totalorder %s23, 3
      %p252 = pnand %p250, %p251
      %p253 = pneg %p252
      // Predicated region
      $region9: #{tpu_custom_call.1} parent=5 // pred_check
        _
      $region10: #{tpu_custom_call.1} parent=5 // pred_check_branch
        %255 = sbr.rel (%p252) target = $region12
      $region11: #{tpu_custom_call.1} parent=5 // pred_region
        %s256 = ssub.s32 %s23, 1
        // Predicated region
        $region13: #{tpu_custom_call.1} parent=11 // pred_check
          %p257 = pneg %p44
        $region14: #{tpu_custom_call.1} parent=11 // pred_check_branch
          %259 = sbr.rel (%p257) target = $region16
        $region15: #{tpu_custom_call.1} parent=11 // pred_region
          %s261 = ssub.s32 64, 64
          %262 = vsyncadd [#allocation3], %s261
          %s264 = sshll.u32 [#allocation2], 4
          %s265 = int_to_ptr.vmem [resolvable:$true] %s264
          %267 = dma.hbm_to_vmem [thread:$0]  %s0, 64, %s265, [#allocation3]
        $region16: #{tpu_custom_call.1} parent=11 // pred_fallthru
          _
        // Predicated region
        $region17: #{tpu_custom_call.1} parent=11 // pred_check
          %p268 = pneg %p65
        $region18: #{tpu_custom_call.1} parent=11 // pred_check_branch
          %270 = sbr.rel (%p268) target = $region20
        $region19: #{tpu_custom_call.1} parent=11 // pred_region
          %s272 = ssub.s32 64, 64
          %273 = vsyncadd [#allocation6], %s272
          %s275 = sshll.u32 [#allocation5], 4
          %s276 = int_to_ptr.vmem [resolvable:$true] %s275
          %278 = dma.hbm_to_vmem [thread:$0]  %s1, 64, %s276, [#allocation6]
        $region20: #{tpu_custom_call.1} parent=11 // pred_fallthru
          _
        // Predicated region
        $region21: #{tpu_custom_call.1} parent=11 // pred_check
          %p279 = pneg %p86
        $region22: #{tpu_custom_call.1} parent=11 // pred_check_branch
          %281 = sbr.rel (%p279) target = $region24
        $region23: #{tpu_custom_call.1} parent=11 // pred_region
          _
        $region24: #{tpu_custom_call.1} parent=11 // pred_fallthru
          _
      $region12: #{tpu_custom_call.1} parent=5 // pred_fallthru
        _
      %p282 = scmp.lt.s32.totalorder %s23, 2
      // Predicated region
      $region25: #{tpu_custom_call.1} parent=5 // pred_check
        %p283 = pneg %p282
      $region26: #{tpu_custom_call.1} parent=5 // pred_check_branch
        %285 = sbr.rel (%p283) target = $region28
      $region27: #{tpu_custom_call.1} parent=5 // pred_region
        // Predicated region
        $region29: #{tpu_custom_call.1} parent=27 // pred_check
          %p286 = pneg %p106
        $region30: #{tpu_custom_call.1} parent=27 // pred_check_branch
          %288 = sbr.rel (%p286) target = $region32
        $region31: #{tpu_custom_call.1} parent=27 // pred_region
          %s289 = sand.u32 %s23, 1
          %s290 = scalar_lea.sflag [#allocation3], %s289
          %s291 = sand.u32 %s96, 1
          %s292 = smul.addr %s291, 128
          %s293 = scalar_lea.vmem [#allocation7], %s292
          %s295 = ssub.s32 2048, 2048
          %296 = vsyncadd %s290, %s295
          %s297 = smul.addr %s23, 64
          %s298 = scalar_lea.hbm %s3, %s297
          %s299 = sshll.u32 %s293, 4
          %s300 = int_to_ptr.vmem [resolvable:$true] %s299
          %305 = dma.hbm_to_vmem [thread:$0]  %s298, 2048, %s300, %s290, 128, 64, 4
        $region32: #{tpu_custom_call.1} parent=27 // pred_fallthru
          _
        // Predicated region
        $region33: #{tpu_custom_call.1} parent=27 // pred_check
          %p306 = pneg %p132
        $region34: #{tpu_custom_call.1} parent=27 // pred_check_branch
          %308 = sbr.rel (%p306) target = $region36
        $region35: #{tpu_custom_call.1} parent=27 // pred_region
          %s309 = sand.u32 %s23, 1
          %s310 = scalar_lea.sflag [#allocation3], %s309
          %s311 = sand.u32 %s122, 1
          %s312 = smul.addr %s311, 128
          %s313 = scalar_lea.vmem [#allocation8], %s312
          %s315 = ssub.s32 2048, 2048
          %316 = vsyncadd %s310, %s315
          %s317 = smul.addr %s23, 64
          %s318 = scalar_lea.hbm %s4, %s317
          %s319 = sshll.u32 %s313, 4
          %s320 = int_to_ptr.vmem [resolvable:$true] %s319
          %325 = dma.hbm_to_vmem [thread:$0]  %s318, 2048, %s320, %s310, 128, 64, 4
        $region36: #{tpu_custom_call.1} parent=27 // pred_fallthru
          _
        // Predicated region
        $region37: #{tpu_custom_call.1} parent=27 // pred_check
          %p326 = pneg %p158
        $region38: #{tpu_custom_call.1} parent=27 // pred_check_branch
          %328 = sbr.rel (%p326) target = $region40
        $region39: #{tpu_custom_call.1} parent=27 // pred_region
          %s329 = sand.u32 %s23, 1
          %s330 = scalar_lea.sflag [#allocation3], %s329
          %s331 = sand.u32 %s148, 1
          %s332 = smul.addr %s331, 128
          %s333 = scalar_lea.vmem [#allocation9], %s332
          %s335 = ssub.s32 2048, 2048
          %336 = vsyncadd %s330, %s335
          %s337 = smul.addr %s23, 64
          %s338 = scalar_lea.hbm %s5, %s337
          %s339 = sshll.u32 %s333, 4
          %s340 = int_to_ptr.vmem [resolvable:$true] %s339
          %345 = dma.hbm_to_vmem [thread:$0]  %s338, 2048, %s340, %s330, 128, 64, 4
        $region40: #{tpu_custom_call.1} parent=27 // pred_fallthru
          _
      $region28: #{tpu_custom_call.1} parent=5 // pred_fallthru
        _
      %p346 = scmp.le.s32.totalorder 1, %s23
      %p347 = scmp.lt.s32.totalorder %s23, 3
      %p348 = pnand %p346, %p347
      %p349 = pneg %p348
      // Predicated region
      $region41: #{tpu_custom_call.1} parent=5 // pred_check
        _
      $region42: #{tpu_custom_call.1} parent=5 // pred_check_branch
        %351 = sbr.rel (%p348) target = $region44
      $region43: #{tpu_custom_call.1} parent=5 // pred_region
        %s352 = ssub.s32 %s23, 1
        // Predicated region
        $region45: #{tpu_custom_call.1} parent=43 // pred_check
          %p353 = pneg %p44
        $region46: #{tpu_custom_call.1} parent=43 // pred_check_branch
          %355 = sbr.rel (%p353) target = $region48
        $region47: #{tpu_custom_call.1} parent=43 // pred_region
          %356 = dma.done [#allocation3], 64
        $region48: #{tpu_custom_call.1} parent=43 // pred_fallthru
          _
        // Predicated region
        $region49: #{tpu_custom_call.1} parent=43 // pred_check
          %p357 = pneg %p65
        $region50: #{tpu_custom_call.1} parent=43 // pred_check_branch
          %359 = sbr.rel (%p357) target = $region52
        $region51: #{tpu_custom_call.1} parent=43 // pred_region
          %360 = dma.done [#allocation6], 64
        $region52: #{tpu_custom_call.1} parent=43 // pred_fallthru
          _
        %s361 = sand.u32 %s28, 1
        %s362 = scalar_lea.sflag [#allocation3], %s361
        %s363 = sand.u32 %s99, 1
        %s364 = smul.addr %s363, 128
        %s365 = scalar_lea.vmem [#allocation7], %s364
        // Predicated region
        $region53: #{tpu_custom_call.1} parent=43 // pred_check
          %p366 = pneg %p112
        $region54: #{tpu_custom_call.1} parent=43 // pred_check_branch
          %368 = sbr.rel (%p366) target = $region56
        $region55: #{tpu_custom_call.1} parent=43 // pred_region
          %369 = dma.done %s362, 2048
        $region56: #{tpu_custom_call.1} parent=43 // pred_fallthru
          _
        %s370 = sand.u32 %s28, 1
        %s371 = scalar_lea.sflag [#allocation3], %s370
        %s372 = sand.u32 %s125, 1
        %s373 = smul.addr %s372, 128
        %s374 = scalar_lea.vmem [#allocation8], %s373
        // Predicated region
        $region57: #{tpu_custom_call.1} parent=43 // pred_check
          %p375 = pneg %p138
        $region58: #{tpu_custom_call.1} parent=43 // pred_check_branch
          %377 = sbr.rel (%p375) target = $region60
        $region59: #{tpu_custom_call.1} parent=43 // pred_region
          %378 = dma.done %s371, 2048
        $region60: #{tpu_custom_call.1} parent=43 // pred_fallthru
          _
        %s379 = sand.u32 %s28, 1
        %s380 = scalar_lea.sflag [#allocation3], %s379
        %s381 = sand.u32 %s151, 1
        %s382 = smul.addr %s381, 128
        %s383 = scalar_lea.vmem [#allocation9], %s382
        // Predicated region
        $region61: #{tpu_custom_call.1} parent=43 // pred_check
          %p384 = pneg %p164
        $region62: #{tpu_custom_call.1} parent=43 // pred_check_branch
          %386 = sbr.rel (%p384) target = $region64
        $region63: #{tpu_custom_call.1} parent=43 // pred_region
          %387 = dma.done %s380, 2048
        $region64: #{tpu_custom_call.1} parent=43 // pred_fallthru
          _
        %p388 = pneg %p44
        %p389 = pneg %p41
        %p390 = pneg %p65
        %p391 = pneg %p62
        %p392 = pneg %p86
        %p393 = pneg %p83
        %s394 = sand.u32 %s28, 1
        %s395 = scalar_lea.sflag [#allocation3], %s394
        %s396 = sand.u32 %s99, 1
        %s397 = smul.addr %s396, 128
        %s398 = scalar_lea.vmem [#allocation7], %s397
        %p399 = pneg %p112
        %p400 = pneg %p109
        %s401 = sand.u32 %s28, 1
        %s402 = scalar_lea.sflag [#allocation3], %s401
        %s403 = sand.u32 %s125, 1
        %s404 = smul.addr %s403, 128
        %s405 = scalar_lea.vmem [#allocation8], %s404
        %p406 = pneg %p138
        %p407 = pneg %p135
        %s408 = sand.u32 %s28, 1
        %s409 = scalar_lea.sflag [#allocation3], %s408
        %s410 = sand.u32 %s151, 1
        %s411 = smul.addr %s410, 128
        %s412 = scalar_lea.vmem [#allocation9], %s411
        %p413 = pneg %p164
        %p414 = pneg %p161
        %p415 = pneg %p190
        %p416 = pneg %p187
        %s417 = sand.u32 %s177, 1
        %s418 = scalar_lea.sflag [#allocation4], %s417
        %s419 = sand.u32 %s177, 1
        %s420 = smul.addr %s419, 2
        %s421 = scalar_lea.vmem [#allocation10], %s420
        %p422 = pneg %p216
        %p423 = pneg %p213
        %s424 = sand.u32 %s28, 1
        %s425 = scalar_lea.sflag [#allocation12], %s424
        %s426 = sand.u32 %s203, 1
        %s427 = smul.addr %s426, 2
        %s428 = scalar_lea.vmem [#allocation11], %s427
        %p429 = pneg %p242
        %p430 = pneg %p239
        %s431 = sand.u32 %s28, 1
        %s432 = scalar_lea.sflag [#allocation12], %s431
        %s433 = sand.u32 %s229, 1
        %s434 = smul.addr %s433, 2
        %s435 = scalar_lea.vmem [#allocation13], %s434
        %v437 = vld [vmem:[#allocation2] sm:$0xf]
        %v440 = vunpack.c.l.s4 1983009808
        %v441 = vunpack.c.0.s8 %v440
        %v442 = vlaneseq
        %v443 = vshrl.u32 %v442, 7
        %v444 = vsub.s32 %v441, %v443
        %v445 = vrot.slane %v437, %v444
        %v446 = vcombine.high %v445, %v445
        %v449 = vpack.c.bf16 %v445, %v445
        %v450 = vpack.c.bf16 %v446, %v446
        %v451 = vld [vmem:[#allocation5] sm:$0xf]
        %v454 = vunpack.c.l.s4 1983009808
        %v455 = vunpack.c.0.s8 %v454
        %v456 = vlaneseq
        %v457 = vshrl.u32 %v456, 7
        %v458 = vsub.s32 %v455, %v457
        %v459 = vrot.slane %v451, %v458
        %v460 = vcombine.high %v459, %v459
        %v463 = vpack.c.bf16 %v459, %v459
        %v464 = vpack.c.bf16 %v460, %v460
        %v465 = vld [vmem:[%s2] sm:$0xf]
        %v468 = vunpack.c.l.s4 1983009808
        %v469 = vunpack.c.0.s8 %v468
        %v470 = vlaneseq
        %v471 = vshrl.u32 %v470, 7
        %v472 = vsub.s32 %v469, %v471
        %v473 = vrot.slane %v465, %v472
        %v474 = vcombine.high %v473, %v473
        %v477 = vpack.c.bf16 %v473, %v473
        %v478 = vpack.c.bf16 %v474, %v474
        %v479 = vld [vmem:[%s365] sm:$0xf]
        %v480 = vld [vmem:[%s365 + $0x4] sm:$0xf]
        %v481 = vld [vmem:[%s365 + $0x8] sm:$0xf]
        %v482 = vld [vmem:[%s365 + $0xc] sm:$0xf]
        %v483 = vld [vmem:[%s365 + $0x10] sm:$0xf]
        %v484 = vld [vmem:[%s365 + $0x14] sm:$0xf]
        %v485 = vld [vmem:[%s365 + $0x18] sm:$0xf]
        %v486 = vld [vmem:[%s365 + $0x1c] sm:$0xf]
        %v487 = vld [vmem:[%s365 + $0x20] sm:$0xf]
        %v488 = vld [vmem:[%s365 + $0x24] sm:$0xf]
        %v489 = vld [vmem:[%s365 + $0x28] sm:$0xf]
        %v490 = vld [vmem:[%s365 + $0x2c] sm:$0xf]
        %v491 = vld [vmem:[%s365 + $0x30] sm:$0xf]
        %v492 = vld [vmem:[%s365 + $0x34] sm:$0xf]
        %v493 = vld [vmem:[%s365 + $0x38] sm:$0xf]
        %v494 = vld [vmem:[%s365 + $0x3c] sm:$0xf]
        %v495 = vld [vmem:[%s365 + $0x40] sm:$0xf]
        %v496 = vld [vmem:[%s365 + $0x44] sm:$0xf]
        %v497 = vld [vmem:[%s365 + $0x48] sm:$0xf]
        %v498 = vld [vmem:[%s365 + $0x4c] sm:$0xf]
        %v499 = vld [vmem:[%s365 + $0x50] sm:$0xf]
        %v500 = vld [vmem:[%s365 + $0x54] sm:$0xf]
        %v501 = vld [vmem:[%s365 + $0x58] sm:$0xf]
        %v502 = vld [vmem:[%s365 + $0x5c] sm:$0xf]
        %v503 = vld [vmem:[%s365 + $0x60] sm:$0xf]
        %v504 = vld [vmem:[%s365 + $0x64] sm:$0xf]
        %v505 = vld [vmem:[%s365 + $0x68] sm:$0xf]
        %v506 = vld [vmem:[%s365 + $0x6c] sm:$0xf]
        %v507 = vld [vmem:[%s365 + $0x70] sm:$0xf]
        %v508 = vld [vmem:[%s365 + $0x74] sm:$0xf]
        %v509 = vld [vmem:[%s365 + $0x78] sm:$0xf]
        %v510 = vld [vmem:[%s365 + $0x7c] sm:$0xf]
        %v543 = vunpack.c.l.b16 %v479
        %v544 = vunpack.c.l.b16 %v480
        %v545 = vunpack.c.l.b16 %v481
        %v546 = vunpack.c.l.b16 %v482
        %v547 = vunpack.c.l.b16 %v483
        %v548 = vunpack.c.l.b16 %v484
        %v549 = vunpack.c.l.b16 %v485
        %v550 = vunpack.c.l.b16 %v486
        %v551 = vunpack.c.l.b16 %v487
        %v552 = vunpack.c.l.b16 %v488
        %v553 = vunpack.c.l.b16 %v489
        %v554 = vunpack.c.l.b16 %v490
        %v555 = vunpack.c.l.b16 %v491
        %v556 = vunpack.c.l.b16 %v492
        %v557 = vunpack.c.l.b16 %v493
        %v558 = vunpack.c.l.b16 %v494
        %v559 = vunpack.c.l.b16 %v495
        %v560 = vunpack.c.l.b16 %v496
        %v561 = vunpack.c.l.b16 %v497
        %v562 = vunpack.c.l.b16 %v498
        %v563 = vunpack.c.l.b16 %v499
        %v564 = vunpack.c.l.b16 %v500
        %v565 = vunpack.c.l.b16 %v501
        %v566 = vunpack.c.l.b16 %v502
        %v567 = vunpack.c.l.b16 %v503
        %v568 = vunpack.c.l.b16 %v504
        %v569 = vunpack.c.l.b16 %v505
        %v570 = vunpack.c.l.b16 %v506
        %v571 = vunpack.c.l.b16 %v507
        %v572 = vunpack.c.l.b16 %v508
        %v573 = vunpack.c.l.b16 %v509
        %v574 = vunpack.c.l.b16 %v510
        %v575 = vpack.c.b16 %v544, %v543
        %v576 = vpack.c.b16 %v546, %v545
        %v577 = vpack.c.b16 %v548, %v547
        %v578 = vpack.c.b16 %v550, %v549
        %v579 = vpack.c.b16 %v552, %v551
        %v580 = vpack.c.b16 %v554, %v553
        %v581 = vpack.c.b16 %v556, %v555
        %v582 = vpack.c.b16 %v558, %v557
        %v583 = vpack.c.b16 %v560, %v559
        %v584 = vpack.c.b16 %v562, %v561
        %v585 = vpack.c.b16 %v564, %v563
        %v586 = vpack.c.b16 %v566, %v565
        %v587 = vpack.c.b16 %v568, %v567
        %v588 = vpack.c.b16 %v570, %v569
        %v589 = vpack.c.b16 %v572, %v571
        %v590 = vpack.c.b16 %v574, %v573
        %607 = vmatprep.subr.bf16.mxu0 0
        %608 = vmatpush1.bf16.msra.mxu0 %v575
        %609 = vmatprep.subr.bf16.mxu0 0
        %610 = vmatpush1.bf16.msra.mxu0 %v576
        %611 = vmatprep.subr.bf16.mxu0 0
        %612 = vmatpush1.bf16.msra.mxu0 %v577
        %613 = vmatprep.subr.bf16.mxu0 0
        %614 = vmatpush1.bf16.msra.mxu0 %v578
        %615 = vmatprep.subr.bf16.mxu0 0
        %616 = vmatpush1.bf16.msra.mxu0 %v579
        %617 = vmatprep.subr.bf16.mxu0 0
        %618 = vmatpush1.bf16.msra.mxu0 %v580
        %619 = vmatprep.subr.bf16.mxu0 0
        %620 = vmatpush1.bf16.msra.mxu0 %v581
        %621 = vmatprep.subr.bf16.mxu0 0
        %622 = vmatpush1.bf16.msra.mxu0 %v582
        %623 = vmatprep.subr.bf16.mxu0 0
        %624 = vmatpush1.bf16.msra.mxu0 %v583
        %625 = vmatprep.subr.bf16.mxu0 0
        %626 = vmatpush1.bf16.msra.mxu0 %v584
        %627 = vmatprep.subr.bf16.mxu0 0
        %628 = vmatpush1.bf16.msra.mxu0 %v585
        %629 = vmatprep.subr.bf16.mxu0 0
        %630 = vmatpush1.bf16.msra.mxu0 %v586
        %631 = vmatprep.subr.bf16.mxu0 0
        %632 = vmatpush1.bf16.msra.mxu0 %v587
        %633 = vmatprep.subr.bf16.mxu0 0
        %634 = vmatpush1.bf16.msra.mxu0 %v588
        %635 = vmatprep.subr.bf16.mxu0 0
        %636 = vmatpush1.bf16.msra.mxu0 %v589
        %637 = vmatprep.subr.bf16.mxu0 0
        %638 = vmatpush1.bf16.msra.mxu0 %v590
        %639 = vmatprep.mubr.bf16.mxu0 %v450
        %640 = vmatmul.mubr.bf16.gmra.mrb[0].mxu0 %v449
        %v641 = vpop.f32.mrb[0].mxu0
        %v642 = vadd.f32 0.0, %v641
        %v643 = vpop.f32.mrb[0].mxu0
        %v644 = vpop.f32.mrb[0].mxu0
        %v645 = vpop.f32.mrb[0].mxu0
        %646 = vdwg.mxu0
        %647 = vst [vmem:[%s421] sm:$0x3] %v642
        %v648 = vld [vmem:[%s374] sm:$0xf]
        %v649 = vld [vmem:[%s374 + $0x4] sm:$0xf]
        %v650 = vld [vmem:[%s374 + $0x8] sm:$0xf]
        %v651 = vld [vmem:[%s374 + $0xc] sm:$0xf]
        %v652 = vld [vmem:[%s374 + $0x10] sm:$0xf]
        %v653 = vld [vmem:[%s374 + $0x14] sm:$0xf]
        %v654 = vld [vmem:[%s374 + $0x18] sm:$0xf]
        %v655 = vld [vmem:[%s374 + $0x1c] sm:$0xf]
        %v656 = vld [vmem:[%s374 + $0x20] sm:$0xf]
        %v657 = vld [vmem:[%s374 + $0x24] sm:$0xf]
        %v658 = vld [vmem:[%s374 + $0x28] sm:$0xf]
        %v659 = vld [vmem:[%s374 + $0x2c] sm:$0xf]
        %v660 = vld [vmem:[%s374 + $0x30] sm:$0xf]
        %v661 = vld [vmem:[%s374 + $0x34] sm:$0xf]
        %v662 = vld [vmem:[%s374 + $0x38] sm:$0xf]
        %v663 = vld [vmem:[%s374 + $0x3c] sm:$0xf]
        %v664 = vld [vmem:[%s374 + $0x40] sm:$0xf]
        %v665 = vld [vmem:[%s374 + $0x44] sm:$0xf]
        %v666 = vld [vmem:[%s374 + $0x48] sm:$0xf]
        %v667 = vld [vmem:[%s374 + $0x4c] sm:$0xf]
        %v668 = vld [vmem:[%s374 + $0x50] sm:$0xf]
        %v669 = vld [vmem:[%s374 + $0x54] sm:$0xf]
        %v670 = vld [vmem:[%s374 + $0x58] sm:$0xf]
        %v671 = vld [vmem:[%s374 + $0x5c] sm:$0xf]
        %v672 = vld [vmem:[%s374 + $0x60] sm:$0xf]
        %v673 = vld [vmem:[%s374 + $0x64] sm:$0xf]
        %v674 = vld [vmem:[%s374 + $0x68] sm:$0xf]
        %v675 = vld [vmem:[%s374 + $0x6c] sm:$0xf]
        %v676 = vld [vmem:[%s374 + $0x70] sm:$0xf]
        %v677 = vld [vmem:[%s374 + $0x74] sm:$0xf]
        %v678 = vld [vmem:[%s374 + $0x78] sm:$0xf]
        %v679 = vld [vmem:[%s374 + $0x7c] sm:$0xf]
        %v712 = vunpack.c.l.b16 %v648
        %v713 = vunpack.c.l.b16 %v649
        %v714 = vunpack.c.l.b16 %v650
        %v715 = vunpack.c.l.b16 %v651
        %v716 = vunpack.c.l.b16 %v652
        %v717 = vunpack.c.l.b16 %v653
        %v718 = vunpack.c.l.b16 %v654
        %v719 = vunpack.c.l.b16 %v655
        %v720 = vunpack.c.l.b16 %v656
        %v721 = vunpack.c.l.b16 %v657
        %v722 = vunpack.c.l.b16 %v658
        %v723 = vunpack.c.l.b16 %v659
        %v724 = vunpack.c.l.b16 %v660
        %v725 = vunpack.c.l.b16 %v661
        %v726 = vunpack.c.l.b16 %v662
        %v727 = vunpack.c.l.b16 %v663
        %v728 = vunpack.c.l.b16 %v664
        %v729 = vunpack.c.l.b16 %v665
        %v730 = vunpack.c.l.b16 %v666
        %v731 = vunpack.c.l.b16 %v667
        %v732 = vunpack.c.l.b16 %v668
        %v733 = vunpack.c.l.b16 %v669
        %v734 = vunpack.c.l.b16 %v670
        %v735 = vunpack.c.l.b16 %v671
        %v736 = vunpack.c.l.b16 %v672
        %v737 = vunpack.c.l.b16 %v673
        %v738 = vunpack.c.l.b16 %v674
        %v739 = vunpack.c.l.b16 %v675
        %v740 = vunpack.c.l.b16 %v676
        %v741 = vunpack.c.l.b16 %v677
        %v742 = vunpack.c.l.b16 %v678
        %v743 = vunpack.c.l.b16 %v679
        %v744 = vpack.c.b16 %v713, %v712
        %v745 = vpack.c.b16 %v715, %v714
        %v746 = vpack.c.b16 %v717, %v716
        %v747 = vpack.c.b16 %v719, %v718
        %v748 = vpack.c.b16 %v721, %v720
        %v749 = vpack.c.b16 %v723, %v722
        %v750 = vpack.c.b16 %v725, %v724
        %v751 = vpack.c.b16 %v727, %v726
        %v752 = vpack.c.b16 %v729, %v728
        %v753 = vpack.c.b16 %v731, %v730
        %v754 = vpack.c.b16 %v733, %v732
        %v755 = vpack.c.b16 %v735, %v734
        %v756 = vpack.c.b16 %v737, %v736
        %v757 = vpack.c.b16 %v739, %v738
        %v758 = vpack.c.b16 %v741, %v740
        %v759 = vpack.c.b16 %v743, %v742
        %776 = vmatprep.subr.bf16.mxu0 0
        %777 = vmatpush1.bf16.msra.mxu0 %v744
        %778 = vmatprep.subr.bf16.mxu0 0
        %779 = vmatpush1.bf16.msra.mxu0 %v745
        %780 = vmatprep.subr.bf16.mxu0 0
        %781 = vmatpush1.bf16.msra.mxu0 %v746
        %782 = vmatprep.subr.bf16.mxu0 0
        %783 = vmatpush1.bf16.msra.mxu0 %v747
        %784 = vmatprep.subr.bf16.mxu0 0
        %785 = vmatpush1.bf16.msra.mxu0 %v748
        %786 = vmatprep.subr.bf16.mxu0 0
        %787 = vmatpush1.bf16.msra.mxu0 %v749
        %788 = vmatprep.subr.bf16.mxu0 0
        %789 = vmatpush1.bf16.msra.mxu0 %v750
        %790 = vmatprep.subr.bf16.mxu0 0
        %791 = vmatpush1.bf16.msra.mxu0 %v751
        %792 = vmatprep.subr.bf16.mxu0 0
        %793 = vmatpush1.bf16.msra.mxu0 %v752
        %794 = vmatprep.subr.bf16.mxu0 0
        %795 = vmatpush1.bf16.msra.mxu0 %v753
        %796 = vmatprep.subr.bf16.mxu0 0
        %797 = vmatpush1.bf16.msra.mxu0 %v754
        %798 = vmatprep.subr.bf16.mxu0 0
        %799 = vmatpush1.bf16.msra.mxu0 %v755
        %800 = vmatprep.subr.bf16.mxu0 0
        %801 = vmatpush1.bf16.msra.mxu0 %v756
        %802 = vmatprep.subr.bf16.mxu0 0
        %803 = vmatpush1.bf16.msra.mxu0 %v757
        %804 = vmatprep.subr.bf16.mxu0 0
        %805 = vmatpush1.bf16.msra.mxu0 %v758
        %806 = vmatprep.subr.bf16.mxu0 0
        %807 = vmatpush1.bf16.msra.mxu0 %v759
        %808 = vmatprep.mubr.bf16.mxu0 %v464
        %809 = vmatmul.mubr.bf16.gmra.mrb[0].mxu0 %v463
        %v810 = vpop.f32.mrb[0].mxu0
        %v811 = vadd.f32 0.0, %v810
        %v812 = vpop.f32.mrb[0].mxu0
        %v813 = vpop.f32.mrb[0].mxu0
        %v814 = vpop.f32.mrb[0].mxu0
        %815 = vdwg.mxu0
        %816 = vst [vmem:[%s428] sm:$0x3] %v811
        %v817 = vld [vmem:[%s383] sm:$0xf]
        %v818 = vld [vmem:[%s383 + $0x4] sm:$0xf]
        %v819 = vld [vmem:[%s383 + $0x8] sm:$0xf]
        %v820 = vld [vmem:[%s383 + $0xc] sm:$0xf]
        %v821 = vld [vmem:[%s383 + $0x10] sm:$0xf]
        %v822 = vld [vmem:[%s383 + $0x14] sm:$0xf]
        %v823 = vld [vmem:[%s383 + $0x18] sm:$0xf]
        %v824 = vld [vmem:[%s383 + $0x1c] sm:$0xf]
        %v825 = vld [vmem:[%s383 + $0x20] sm:$0xf]
        %v826 = vld [vmem:[%s383 + $0x24] sm:$0xf]
        %v827 = vld [vmem:[%s383 + $0x28] sm:$0xf]
        %v828 = vld [vmem:[%s383 + $0x2c] sm:$0xf]
        %v829 = vld [vmem:[%s383 + $0x30] sm:$0xf]
        %v830 = vld [vmem:[%s383 + $0x34] sm:$0xf]
        %v831 = vld [vmem:[%s383 + $0x38] sm:$0xf]
        %v832 = vld [vmem:[%s383 + $0x3c] sm:$0xf]
        %v833 = vld [vmem:[%s383 + $0x40] sm:$0xf]
        %v834 = vld [vmem:[%s383 + $0x44] sm:$0xf]
        %v835 = vld [vmem:[%s383 + $0x48] sm:$0xf]
        %v836 = vld [vmem:[%s383 + $0x4c] sm:$0xf]
        %v837 = vld [vmem:[%s383 + $0x50] sm:$0xf]
        %v838 = vld [vmem:[%s383 + $0x54] sm:$0xf]
        %v839 = vld [vmem:[%s383 + $0x58] sm:$0xf]
        %v840 = vld [vmem:[%s383 + $0x5c] sm:$0xf]
        %v841 = vld [vmem:[%s383 + $0x60] sm:$0xf]
        %v842 = vld [vmem:[%s383 + $0x64] sm:$0xf]
        %v843 = vld [vmem:[%s383 + $0x68] sm:$0xf]
        %v844 = vld [vmem:[%s383 + $0x6c] sm:$0xf]
        %v845 = vld [vmem:[%s383 + $0x70] sm:$0xf]
        %v846 = vld [vmem:[%s383 + $0x74] sm:$0xf]
        %v847 = vld [vmem:[%s383 + $0x78] sm:$0xf]
        %v848 = vld [vmem:[%s383 + $0x7c] sm:$0xf]
        %v881 = vunpack.c.l.b16 %v817
        %v882 = vunpack.c.l.b16 %v818
        %v883 = vunpack.c.l.b16 %v819
        %v884 = vunpack.c.l.b16 %v820
        %v885 = vunpack.c.l.b16 %v821
        %v886 = vunpack.c.l.b16 %v822
        %v887 = vunpack.c.l.b16 %v823
        %v888 = vunpack.c.l.b16 %v824
        %v889 = vunpack.c.l.b16 %v825
        %v890 = vunpack.c.l.b16 %v826
        %v891 = vunpack.c.l.b16 %v827
        %v892 = vunpack.c.l.b16 %v828
        %v893 = vunpack.c.l.b16 %v829
        %v894 = vunpack.c.l.b16 %v830
        %v895 = vunpack.c.l.b16 %v831
        %v896 = vunpack.c.l.b16 %v832
        %v897 = vunpack.c.l.b16 %v833
        %v898 = vunpack.c.l.b16 %v834
        %v899 = vunpack.c.l.b16 %v835
        %v900 = vunpack.c.l.b16 %v836
        %v901 = vunpack.c.l.b16 %v837
        %v902 = vunpack.c.l.b16 %v838
        %v903 = vunpack.c.l.b16 %v839
        %v904 = vunpack.c.l.b16 %v840
        %v905 = vunpack.c.l.b16 %v841
        %v906 = vunpack.c.l.b16 %v842
        %v907 = vunpack.c.l.b16 %v843
        %v908 = vunpack.c.l.b16 %v844
        %v909 = vunpack.c.l.b16 %v845
        %v910 = vunpack.c.l.b16 %v846
        %v911 = vunpack.c.l.b16 %v847
        %v912 = vunpack.c.l.b16 %v848
        %v913 = vpack.c.b16 %v882, %v881
        %v914 = vpack.c.b16 %v884, %v883
        %v915 = vpack.c.b16 %v886, %v885
        %v916 = vpack.c.b16 %v888, %v887
        %v917 = vpack.c.b16 %v890, %v889
        %v918 = vpack.c.b16 %v892, %v891
        %v919 = vpack.c.b16 %v894, %v893
        %v920 = vpack.c.b16 %v896, %v895
        %v921 = vpack.c.b16 %v898, %v897
        %v922 = vpack.c.b16 %v900, %v899
        %v923 = vpack.c.b16 %v902, %v901
        %v924 = vpack.c.b16 %v904, %v903
        %v925 = vpack.c.b16 %v906, %v905
        %v926 = vpack.c.b16 %v908, %v907
        %v927 = vpack.c.b16 %v910, %v909
        %v928 = vpack.c.b16 %v912, %v911
        %945 = vmatprep.subr.bf16.mxu0 0
        %946 = vmatpush1.bf16.msra.mxu0 %v913
        %947 = vmatprep.subr.bf16.mxu0 0
        %948 = vmatpush1.bf16.msra.mxu0 %v914
        %949 = vmatprep.subr.bf16.mxu0 0
        %950 = vmatpush1.bf16.msra.mxu0 %v915
        %951 = vmatprep.subr.bf16.mxu0 0
        %952 = vmatpush1.bf16.msra.mxu0 %v916
        %953 = vmatprep.subr.bf16.mxu0 0
        %954 = vmatpush1.bf16.msra.mxu0 %v917
        %955 = vmatprep.subr.bf16.mxu0 0
        %956 = vmatpush1.bf16.msra.mxu0 %v918
        %957 = vmatprep.subr.bf16.mxu0 0
        %958 = vmatpush1.bf16.msra.mxu0 %v919
        %959 = vmatprep.subr.bf16.mxu0 0
        %960 = vmatpush1.bf16.msra.mxu0 %v920
        %961 = vmatprep.subr.bf16.mxu0 0
        %962 = vmatpush1.bf16.msra.mxu0 %v921
        %963 = vmatprep.subr.bf16.mxu0 0
        %964 = vmatpush1.bf16.msra.mxu0 %v922
        %965 = vmatprep.subr.bf16.mxu0 0
        %966 = vmatpush1.bf16.msra.mxu0 %v923
        %967 = vmatprep.subr.bf16.mxu0 0
        %968 = vmatpush1.bf16.msra.mxu0 %v924
        %969 = vmatprep.subr.bf16.mxu0 0
        %970 = vmatpush1.bf16.msra.mxu0 %v925
        %971 = vmatprep.subr.bf16.mxu0 0
        %972 = vmatpush1.bf16.msra.mxu0 %v926
        %973 = vmatprep.subr.bf16.mxu0 0
        %974 = vmatpush1.bf16.msra.mxu0 %v927
        %975 = vmatprep.subr.bf16.mxu0 0
        %976 = vmatpush1.bf16.msra.mxu0 %v928
        %977 = vmatprep.mubr.bf16.mxu0 %v478
        %978 = vmatmul.mubr.bf16.gmra.mrb[0].mxu0 %v477
        %v979 = vpop.f32.mrb[0].mxu0
        %v980 = vadd.f32 0.0, %v979
        %v981 = vpop.f32.mrb[0].mxu0
        %v982 = vpop.f32.mrb[0].mxu0
        %v983 = vpop.f32.mrb[0].mxu0
        %984 = vdwg.mxu0
        %985 = vst [vmem:[%s435] sm:$0x3] %v980
        %s986 = sand.u32 %s177, 1
        %s987 = scalar_lea.sflag [#allocation4], %s986
        %s988 = sand.u32 %s177, 1
        %s989 = smul.addr %s988, 2
        %s990 = scalar_lea.vmem [#allocation10], %s989
        %s991 = sand.u32 %s28, 1
        %s992 = scalar_lea.sflag [#allocation12], %s991
        %s993 = sand.u32 %s203, 1
        %s994 = smul.addr %s993, 2
        %s995 = scalar_lea.vmem [#allocation11], %s994
        %s996 = sand.u32 %s28, 1
        %s997 = scalar_lea.sflag [#allocation12], %s996
        %s998 = sand.u32 %s229, 1
        %s999 = smul.addr %s998, 2
        %s1000 = scalar_lea.vmem [#allocation13], %s999
        // Predicated region
        $region65: #{tpu_custom_call.1} parent=43 // pred_check
          %p1001 = pneg %p187
        $region66: #{tpu_custom_call.1} parent=43 // pred_check_branch
          %1003 = sbr.rel (%p1001) target = $region68
        $region67: #{tpu_custom_call.1} parent=43 // pred_region
          %s1005 = ssub.s32 32, 32
          %1006 = vsyncadd %s987, %s1005
          %s1007 = smul.addr %s28, 32
          %s1008 = scalar_lea.hbm %s6, %s1007
          %s1010 = sshll.u32 %s990, 4
          %s1011 = int_to_ptr.vmem [resolvable:$true] %s1010
          %1013 = dma.vmem_to_hbm [thread:$0]  %s1011, 32, %s1008, %s987
        $region68: #{tpu_custom_call.1} parent=43 // pred_fallthru
          _
        // Predicated region
        $region69: #{tpu_custom_call.1} parent=43 // pred_check
          %p1014 = pneg %p213
        $region70: #{tpu_custom_call.1} parent=43 // pred_check_branch
          %1016 = sbr.rel (%p1014) target = $region72
        $region71: #{tpu_custom_call.1} parent=43 // pred_region
          %s1018 = ssub.s32 32, 32
          %1019 = vsyncadd %s992, %s1018
          %s1020 = smul.addr %s28, 32
          %s1021 = scalar_lea.hbm %s7, %s1020
          %s1023 = sshll.u32 %s995, 4
          %s1024 = int_to_ptr.vmem [resolvable:$true] %s1023
          %1026 = dma.vmem_to_hbm [thread:$0]  %s1024, 32, %s1021, %s992
        $region72: #{tpu_custom_call.1} parent=43 // pred_fallthru
          _
        // Predicated region
        $region73: #{tpu_custom_call.1} parent=43 // pred_check
          %p1027 = pneg %p239
        $region74: #{tpu_custom_call.1} parent=43 // pred_check_branch
          %1029 = sbr.rel (%p1027) target = $region76
        $region75: #{tpu_custom_call.1} parent=43 // pred_region
          %s1031 = ssub.s32 32, 32
          %1032 = vsyncadd %s997, %s1031
          %s1033 = smul.addr %s28, 32
          %s1034 = scalar_lea.hbm %s8, %s1033
          %s1036 = sshll.u32 %s1000, 4
          %s1037 = int_to_ptr.vmem [resolvable:$true] %s1036
          %1039 = dma.vmem_to_hbm [thread:$0]  %s1037, 32, %s1034, %s997
        $region76: #{tpu_custom_call.1} parent=43 // pred_fallthru
          _
      $region44: #{tpu_custom_call.1} parent=5 // pred_fallthru
        _
      %p1040 = scmp.le.s32.totalorder 2, %s23
      // Predicated region
      $region77: #{tpu_custom_call.1} parent=5 // pred_check
        %p1041 = pneg %p1040
      $region78: #{tpu_custom_call.1} parent=5 // pred_check_branch
        %1043 = sbr.rel (%p1041) target = $region80
      $region79: #{tpu_custom_call.1} parent=5 // pred_region
        %s1044 = ssub.s32 %s23, 2
        // Predicated region
        $region81: #{tpu_custom_call.1} parent=79 // pred_check
          %p1045 = pneg %p193
        $region82: #{tpu_custom_call.1} parent=79 // pred_check_branch
          %1047 = sbr.rel (%p1045) target = $region84
        $region83: #{tpu_custom_call.1} parent=79 // pred_region
          %s1048 = sand.u32 %s178, 1
          %s1049 = scalar_lea.sflag [#allocation4], %s1048
          %s1050 = sand.u32 %s178, 1
          %s1051 = smul.addr %s1050, 2
          %s1052 = scalar_lea.vmem [#allocation10], %s1051
          %1053 = dma.done %s1049, 32
        $region84: #{tpu_custom_call.1} parent=79 // pred_fallthru
          _
        // Predicated region
        $region85: #{tpu_custom_call.1} parent=79 // pred_check
          %p1054 = pneg %p219
        $region86: #{tpu_custom_call.1} parent=79 // pred_check_branch
          %1056 = sbr.rel (%p1054) target = $region88
        $region87: #{tpu_custom_call.1} parent=79 // pred_region
          %s1057 = sand.u32 %s29, 1
          %s1058 = scalar_lea.sflag [#allocation12], %s1057
          %s1059 = sand.u32 %s204, 1
          %s1060 = smul.addr %s1059, 2
          %s1061 = scalar_lea.vmem [#allocation11], %s1060
          %1062 = dma.done %s1058, 32
        $region88: #{tpu_custom_call.1} parent=79 // pred_fallthru
          _
        // Predicated region
        $region89: #{tpu_custom_call.1} parent=79 // pred_check
          %p1063 = pneg %p245
        $region90: #{tpu_custom_call.1} parent=79 // pred_check_branch
          %1065 = sbr.rel (%p1063) target = $region92
        $region91: #{tpu_custom_call.1} parent=79 // pred_region
          %s1066 = sand.u32 %s29, 1
          %s1067 = scalar_lea.sflag [#allocation12], %s1066
          %s1068 = sand.u32 %s230, 1
          %s1069 = smul.addr %s1068, 2
          %s1070 = scalar_lea.vmem [#allocation13], %s1069
          %1071 = dma.done %s1067, 32
        $region92: #{tpu_custom_call.1} parent=79 // pred_fallthru
          _
      $region80: #{tpu_custom_call.1} parent=5 // pred_fallthru
        _
    $region6: #{tpu_custom_call.1} parent=1 // loop_footer
      %s27 = sadd.s32 1, %s23
    $region7: #{tpu_custom_call.1} parent=1 // loop_footer_branch
      %22 = sbr.rel target = $region3
    $region8: #{tpu_custom_call.1} parent=1 // loop_exit
      _
    %1072 = vsyncpa [#allocation3], 1
    %s1073 = scalar_lea.sflag [#allocation3], 1
    %1074 = vsyncpa %s1073, 1
    %1075 = vsyncpa [#allocation6], 1
    %1076 = vsyncpa [#allocation4], 1
    %s1077 = scalar_lea.sflag [#allocation4], 1
    %1078 = vsyncpa %s1077, 1
    %1079 = vsyncpa [#allocation12], 1
    %s1080 = scalar_lea.sflag [#allocation12], 1
    %1081 = vsyncpa %s1080, 1

</llo_original>
